<compile_context>
chip_gen: v5e
topology: v5e:2x2
jax: 0.10.0
libtpu: 0.0.40
codegen_flags: <defaults>
</compile_context>

<pallas_src>
import jax
import jax.numpy as jnp
from jax.experimental import pallas as pl
from jax.experimental.pallas import tpu as pltpu


# ----------------------------- Pallas kernel --------------------------------
def _conv_relu_bn_kernel(x_ref, w_ref, p_ref, o_ref):
    """One (sample, L-tile) grid step.

    x_ref: (2*C_in, TL+1)  even/odd-interleaved phase window (+1 halo column)
    w_ref: (2, C_out, 2*C_in) packed conv taps: w[0]=[W0|W1], w[1]=[W2|W3]
    p_ref: (C_out, 3) f32  columns = [conv bias | bn scale | bn shift]
    o_ref: (C_out, TL) f32 lane-dense NCL output tile
    """
    tl = o_ref.shape[-1]
    x = x_ref[...]                                       # (2*C_in, TL+1)

    # stride-2 conv as 2 tap matmuls on the interleaved phase stream (MXU, f32 acc):
    #   y[:, l] = [W0|W1] @ x_eo[:, l] + [W2|W3] @ x_eo[:, l+1]
    acc = jnp.dot(w_ref[0], x[:, :tl], preferred_element_type=jnp.float32)
    acc = acc + jnp.dot(w_ref[1], x[:, 1:], preferred_element_type=jnp.float32)

    bias = p_ref[:, 0:1]                                 # (C_out, 1) broadcasts along lanes
    scale = p_ref[:, 1:2]
    shift = p_ref[:, 2:3]

    y = jnp.maximum(acc + bias, 0.0)                     # conv bias + ReLU (Dropout=identity)
    o_ref[...] = (y * scale + shift).astype(o_ref.dtype)  # folded eval-mode BatchNorm


# ------------------------------ host wrapper ---------------------------------
def _pick_l_tile(l_out, target=512):
    """Largest tile <= target that is a multiple of 128 and divides L_out (else full L_out)."""
    if l_out <= target:
        return l_out
    for tl in range(target, 0, -128):
        if l_out % tl == 0:
            return tl
    return l_out


def downsample_block_forward(x, params, *, l_tile=None,
                             compute_dtype=jnp.bfloat16, vmem_limit_bytes=None):
    """x: (N, C_in, L) float32 (NCL, PyTorch layout). Returns (N, C_out, L_out) float32 NCL."""
    w, b = params["weight"], params["bias"]
    gamma, beta = params["gamma"], params["beta"]
    run_mean, run_var, eps = params["running_mean"], params["running_var"], params["eps"]

    N, C_in, L = x.shape
    C_out, _, K = w.shape
    stride = 2
    padding = 2 * stride + K + 1                          # = 9 (as in the PyTorch module)
    L_out = (L + 2 * padding - K) // stride + 1

    if l_tile is None:
        tl = _pick_l_tile(L_out)
    else:
        tl = int(l_tile)
        if L_out % tl != 0 or not (tl == L_out or tl % 128 == 0):
            raise ValueError("l_tile must divide L_out and be a multiple of 128 (or == L_out)")
    n_lt = L_out // tl

    # ---- glue (pure JAX, fused by XLA): pad, even/odd phase split interleaved on
    #      channels, overlapping L-tiles (halo = 1 col), cast to compute dtype. ----
    x_pad = jnp.pad(x, ((0, 0), (0, 0), (padding, padding)))
    L_half = L_out + 1
    x_even = x_pad[:, :, 0::2][:, :, :L_half]             # (N, C_in, L_out+1)
    x_odd = x_pad[:, :, 1::2][:, :, :L_half]
    x_eo = jnp.concatenate([x_even, x_odd], axis=1)        # (N, 2*C_in, L_out+1)

    win = tl * jnp.arange(n_lt)[:, None] + jnp.arange(tl + 1)[None, :]   # (n_lt, tl+1)
    x_win = x_eo[:, :, win].transpose(0, 2, 1, 3).astype(compute_dtype)  # (N, n_lt, 2*C_in, tl+1)

    # Packed conv taps: w[0]=[W0|W1], w[1]=[W2|W3]  (concatenated along C_in).
    w_a = jnp.concatenate([w[:, :, 0], w[:, :, 1]], axis=1)              # (C_out, 2*C_in)
    w_b = jnp.concatenate([w[:, :, 2], w[:, :, 3]], axis=1)
    w_packed = jnp.stack([w_a, w_b], axis=0).astype(compute_dtype)       # (2, C_out, 2*C_in)

    # eval-mode BatchNorm folded into per-channel scale/shift (applied AFTER ReLU —
    # scale can be negative so it cannot be folded into the conv weights).
    scale = gamma / jnp.sqrt(run_var + eps)
    shift = beta - run_mean * scale
    p_packed = jnp.stack([b, scale, shift], axis=1).astype(jnp.float32)  # (C_out, 3)

    itm = jnp.dtype(compute_dtype).itemsize
    flops = 2 * N * L_out * C_out * C_in * K
    bytes_accessed = ((N * n_lt * 2 * C_in * (tl + 1) + 2 * C_out * 2 * C_in) * itm
                      + C_out * 3 * 4 + N * C_out * L_out * 4)

    out = pl.pallas_call(
        _conv_relu_bn_kernel,
        out_shape=jax.ShapeDtypeStruct((N, C_out, L_out), jnp.float32),
        grid_spec=pltpu.PrefetchScalarGridSpec(
            num_scalar_prefetch=0,
            grid=(N, n_lt),
            in_specs=[
                pl.BlockSpec((None, None, 2 * C_in, tl + 1), lambda n, j: (n, j, 0, 0)),
                pl.BlockSpec((2, C_out, 2 * C_in), lambda n, j: (0, 0, 0)),
                pl.BlockSpec((C_out, 3), lambda n, j: (0, 0)),
            ],
            out_specs=pl.BlockSpec((None, C_out, tl), lambda n, j: (n, 0, j)),
        ),
        compiler_params=pltpu.CompilerParams(
            dimension_semantics=("parallel", "parallel"),
            vmem_limit_bytes=vmem_limit_bytes,
        ),
        cost_estimate=pl.CostEstimate(flops=flops, transcendentals=0,
                                      bytes_accessed=bytes_accessed),
    )(x_win, w_packed, p_packed)

    return out                                             # already NCL (N, C_out, L_out)


# ----------------------- deterministic parameter init -----------------------
def init_params(key, d_in, kernel_size=4):
    d_out = d_in // 2
    k_w, k_b, k_g, k_be, k_rm, k_rv = jax.random.split(key, 6)
    fan_in = d_in * kernel_size
    bound = 1.0 / (fan_in ** 0.5)                          # PyTorch Conv1d default init range
    return {
        "weight": jax.random.uniform(k_w, (d_out, d_in, kernel_size),
                                     minval=-bound, maxval=bound, dtype=jnp.float32),
        "bias": jax.random.uniform(k_b, (d_out,), minval=-bound, maxval=bound,
                                   dtype=jnp.float32),
        "gamma": 1.0 + 0.1 * jax.random.normal(k_g, (d_out,), dtype=jnp.float32),
        "beta": 0.1 * jax.random.normal(k_be, (d_out,), dtype=jnp.float32),
        "running_mean": 0.1 * jax.random.normal(k_rm, (d_out,), dtype=jnp.float32),
        "running_var": 1.0 + 0.1 * jax.random.uniform(k_rv, (d_out,), dtype=jnp.float32),
        "eps": 1e-5,
    }


# ------------------------------ pure-JAX reference ---------------------------
def reference_forward(x, params):
    w, b = params["weight"], params["bias"]
    y = jax.lax.conv_general_dilated(
        x, w, window_strides=(2,), padding=[(9, 9)],
        dimension_numbers=("NCH", "OIH", "NCH"),
    ) + b[None, :, None]
    y = jnp.maximum(y, 0.0)
    scale = params["gamma"] / jnp.sqrt(params["running_var"] + params["eps"])
    shift = params["beta"] - params["running_mean"] * scale
    return y * scale[None, :, None] + shift[None, :, None]


if __name__ == "__main__":
    key = jax.random.PRNGKey(0)
    k_x, k_p, k_x2 = jax.random.split(key, 3)

    # ---- small single-tile case: N=2, d_in=8, L=16 -> d_out=4, L_out=16 ----
    N, d_in, L = 2, 8, 16
    x = jax.random.normal(k_x, (N, d_in, L), dtype=jnp.float32)
    params = init_params(k_p, d_in)
    ref = reference_forward(x, params)

    # f32 operand path: matches the reference tightly.
    out_f32 = jax.block_until_ready(
        downsample_block_forward(x, params, compute_dtype=jnp.float32))
    assert out_f32.shape == ref.shape, (out_f32.shape, ref.shape)
    assert jnp.allclose(out_f32, ref, atol=1e-5, rtol=1e-5), \
        float(jnp.max(jnp.abs(out_f32 - ref)))

    # default bf16 operand path (f32 accumulate + f32 epilogue): halves HBM traffic.
    out_bf16 = jax.block_until_ready(downsample_block_forward(x, params))
    assert out_bf16.shape == ref.shape, (out_bf16.shape, ref.shape)
    assert jnp.allclose(out_bf16, ref, atol=5e-2, rtol=5e-2), \
        float(jnp.max(jnp.abs(out_bf16 - ref)))

    # ---- modest multi-tile case (exercises the tiled / halo path): L_out=256, tl=128 ----
    L2 = 496                                               # L_out = (496 + 18 - 4)//2 + 1 = 256
    x2 = jax.random.normal(k_x2, (N, d_in, L2), dtype=jnp.float32)
    ref2 = reference_forward(x2, params)
    out2 = jax.block_until_ready(
        downsample_block_forward(x2, params, l_tile=128, compute_dtype=jnp.float32))
    assert out2.shape == ref2.shape, (out2.shape, ref2.shape)
    assert jnp.allclose(out2, ref2, atol=1e-4, rtol=1e-4), \
        float(jnp.max(jnp.abs(out2 - ref2)))

    print("KERNEL_OK")
</pallas_src>

<mosaic_0001>
module attributes {stable_mosaic.version = 11 : i64} {
  func.func @_conv_relu_bn_kernel(%arg0: i32, %arg1: i32, %arg2: memref<1x1x16x17xf32, #tpu.memory_space<vmem>>, %arg3: memref<2x4x16xf32, #tpu.memory_space<vmem>>, %arg4: memref<4x3xf32, #tpu.memory_space<vmem>>, %arg5: memref<1x4x16xf32, #tpu.memory_space<vmem>>) attributes {dimension_semantics = [#tpu.dimension_semantics<parallel>, #tpu.dimension_semantics<parallel>], iteration_bounds = array<i64: 2, 1>, scalar_prefetch = 0 : i64, scratch_operands = 0 : i64, tpu.core_type = #tpu.core_type<tc>, window_params = [{transform_indices = @transform_0, window_bounds = array<i64: 1, 1, 16, 17>}, {pipeline_mode = #tpu.pipeline_mode<synchronous>, transform_indices = @transform_1, window_bounds = array<i64: 2, 4, 16>}, {pipeline_mode = #tpu.pipeline_mode<synchronous>, transform_indices = @transform_2, window_bounds = array<i64: 4, 3>}, {transform_indices = @transform_3, window_bounds = array<i64: 1, 4, 16>}]} {
    %c0 = arith.constant 0 : index
    %c0_0 = arith.constant 0 : index
    %c0_1 = arith.constant 0 : index
    %c0_2 = arith.constant 0 : index
    %0 = vector.load %arg2[%c0, %c0_0, %c0_1, %c0_2] : memref<1x1x16x17xf32, #tpu.memory_space<vmem>>, vector<1x1x16x17xf32>
    %1 = vector.shape_cast %0 : vector<1x1x16x17xf32> to vector<16x17xf32>
    %c0_3 = arith.constant 0 : index
    %c0_4 = arith.constant 0 : index
    %c0_5 = arith.constant 0 : index
    %2 = vector.load %arg3[%c0_3, %c0_4, %c0_5] : memref<2x4x16xf32, #tpu.memory_space<vmem>>, vector<1x4x16xf32>
    %3 = vector.shape_cast %2 : vector<1x4x16xf32> to vector<4x16xf32>
    %4 = vector.extract_strided_slice %1 {offsets = [0, 0], sizes = [16, 16], strides = [1, 1]} : vector<16x17xf32> to vector<16x16xf32>
    %cst = arith.constant dense<0.000000e+00> : vector<4x16xf32>
    %5 = tpu.matmul %3, %4, %cst {dimension_numbers = #tpu.dot_dimension_numbers<[1], [0], [0], [1], [0, 0, 1, 1], [], []>} : vector<4x16xf32>, vector<16x16xf32>, vector<4x16xf32> -> vector<4x16xf32>
    %c1 = arith.constant 1 : index
    %c0_6 = arith.constant 0 : index
    %c0_7 = arith.constant 0 : index
    %6 = vector.load %arg3[%c1, %c0_6, %c0_7] : memref<2x4x16xf32, #tpu.memory_space<vmem>>, vector<1x4x16xf32>
    %7 = vector.shape_cast %6 : vector<1x4x16xf32> to vector<4x16xf32>
    %8 = vector.extract_strided_slice %1 {offsets = [0, 1], sizes = [16, 16], strides = [1, 1]} : vector<16x17xf32> to vector<16x16xf32>
    %cst_8 = arith.constant dense<0.000000e+00> : vector<4x16xf32>
    %9 = tpu.matmul %7, %8, %cst_8 {dimension_numbers = #tpu.dot_dimension_numbers<[1], [0], [0], [1], [0, 0, 1, 1], [], []>} : vector<4x16xf32>, vector<16x16xf32>, vector<4x16xf32> -> vector<4x16xf32>
    %10 = arith.addf %5, %9 : vector<4x16xf32>
    %c0_9 = arith.constant 0 : index
    %c0_10 = arith.constant 0 : index
    %11 = vector.load %arg4[%c0_9, %c0_10] : memref<4x3xf32, #tpu.memory_space<vmem>>, vector<4x1xf32>
    %c0_11 = arith.constant 0 : index
    %c1_12 = arith.constant 1 : index
    %12 = vector.load %arg4[%c0_11, %c1_12] : memref<4x3xf32, #tpu.memory_space<vmem>>, vector<4x1xf32>
    %c0_13 = arith.constant 0 : index
    %c2 = arith.constant 2 : index
    %13 = vector.load %arg4[%c0_13, %c2] : memref<4x3xf32, #tpu.memory_space<vmem>>, vector<4x1xf32>
    %14 = vector.broadcast %11 : vector<4x1xf32> to vector<4x16xf32>
    %15 = arith.addf %10, %14 : vector<4x16xf32>
    %cst_14 = arith.constant 0.000000e+00 : f32
    %16 = vector.broadcast %cst_14 : f32 to vector<4x16xf32>
    %17 = arith.maximumf %15, %16 : vector<4x16xf32>
    %18 = vector.broadcast %12 : vector<4x1xf32> to vector<4x16xf32>
    %19 = arith.mulf %17, %18 : vector<4x16xf32>
    %20 = vector.broadcast %13 : vector<4x1xf32> to vector<4x16xf32>
    %21 = arith.addf %19, %20 : vector<4x16xf32>
    %c0_15 = arith.constant 0 : index
    %c0_16 = arith.constant 0 : index
    %c0_17 = arith.constant 0 : index
    %22 = vector.load %arg5[%c0_15, %c0_16, %c0_17] : memref<1x4x16xf32, #tpu.memory_space<vmem>>, vector<1x4x16xf32>
    %23 = vector.shape_cast %22 : vector<1x4x16xf32> to vector<4x16xf32>
    %24 = vector.shape_cast %21 : vector<4x16xf32> to vector<1x4x16xf32>
    tpu.vector_store %arg5[%c0_15, %c0_16, %c0_17], %24 {strides = array<i32>} : memref<1x4x16xf32, #tpu.memory_space<vmem>>, vector<1x4x16xf32>,
    return
  }
  func.func @transform_0(%arg0: i32, %arg1: i32) -> (i32, i32, i32, i32) {
    %c0_i32 = arith.constant 0 : i32
    %c0_i32_0 = arith.constant 0 : i32
    %c0_i32_1 = arith.constant 0 : i32
    return %arg0, %arg1, %c0_i32, %c0_i32_0 : i32, i32, i32, i32
  }
  func.func @transform_1(%arg0: i32, %arg1: i32) -> (i32, i32, i32) {
    %c0_i32 = arith.constant 0 : i32
    %c0_i32_0 = arith.constant 0 : i32
    %c0_i32_1 = arith.constant 0 : i32
    %c0_i32_2 = arith.constant 0 : i32
    return %c0_i32, %c0_i32_0, %c0_i32_1 : i32, i32, i32
  }
  func.func @transform_2(%arg0: i32, %arg1: i32) -> (i32, i32) {
    %c0_i32 = arith.constant 0 : i32
    %c0_i32_0 = arith.constant 0 : i32
    %c0_i32_1 = arith.constant 0 : i32
    return %c0_i32, %c0_i32_0 : i32, i32
  }
  func.func @transform_3(%arg0: i32, %arg1: i32) -> (i32, i32, i32) {
    %c0_i32 = arith.constant 0 : i32
    %c0_i32_0 = arith.constant 0 : i32
    return %arg0, %c0_i32, %arg1 : i32, i32, i32
  }
}

</mosaic_0001>

<llo_original>
// kernel: tpu_custom_call.1
$region0: #{tpu_custom_call.1}
  #allocation0 [shape = 'u32[]', space=smem, size = 0x4, offset = 0x4, fixed_abs, tag = 'smem constant byte address 0x4 - core index']
  #allocation1 [shape = 'u32[72,128]{1,0:T(1,128)}', space=vmem, size = 0x9000, scoped, tag = 'internal scratch']
  %s0 = inlined_call_operand.hbm [shape: f32[2,1,16,17], index: 0, kind: input, shape index: {}]
  %s1 = inlined_call_operand.hbm [shape: f32[2,4,16], index: 1, kind: input, shape index: {}]
  %s2 = inlined_call_operand.hbm [shape: f32[4,3], index: 2, kind: input, shape index: {}]
  %s3 = inlined_call_operand.hbm [shape: f32[2,4,16], index: 3, kind: output, shape index: {}]
  %s4 = sld [smem:[#allocation0]]
  $region57: #{tpu_custom_call.1} parent=0
    _
  %s6 = ssub.s32 1, %s4
  %s7 = scalar_select 0, %s6, %s4
  $region1: #{tpu_custom_call.1} parent=0
    #allocation2 [shape = 'u8[16384]{0}', space=vmem, size = 0x4000, scoped, tag = 'input window, operand 0']
    #allocation3 [shape = 's32[2]{0}', space=sflag, size = 0x8, scoped, tag = 'scoped memory for tpu_custom_call.1']
    #allocation4 [shape = 's32[2]{0}', space=sflag, size = 0x8, scoped, tag = 'scoped memory for tpu_custom_call.1']
    #allocation5 [shape = 'u8[4096]{0}', space=vmem, size = 0x1000, scoped, tag = 'input window, operand 1, single buffered']
    #allocation6 [shape = 's32[1]{0}', space=sflag, size = 0x4, scoped, tag = 'scoped memory for tpu_custom_call.1']
    #allocation7 [shape = 'u8[2048]{0}', space=vmem, size = 0x800, scoped, tag = 'input window, operand 2, single buffered']
    #allocation8 [shape = 'u8[4096]{0}', space=vmem, size = 0x1000, scoped, tag = 'output window, operand 0']
    %8 = vsyncpa [#allocation3], 0
    %s9 = scalar_lea.sflag [#allocation3], 1
    %10 = vsyncpa %s9, 0
    %11 = vsyncpa [#allocation6], 0
    %12 = vsyncpa [#allocation4], 0
    %s13 = scalar_lea.sflag [#allocation4], 1
    %14 = vsyncpa %s13, 0
    loop: start=0, step=1, limit=4
    $region2: #{tpu_custom_call.1} parent=1 // loop_pre_header
      _
    $region3: #{tpu_custom_call.1} parent=1 // loop_header
      %s16 = sphi 0, %s20
      %p17 = scmp.ge.s32.totalorder %s16, 4
      %s23 = sphi 0, %s35
      %s24 = sphi 0, %s31
      %s25 = sphi 0, %s23
      %s26 = sphi 0, %s24
      %s27 = sphi 0, %s25
      %s28 = sphi 0, %s26
      %s40 = sphi 0, %s42
      %s43 = sphi 0, %s40
      %s44 = sphi 0, %s43
      %s60 = sphi 0, %s44
      %s64 = sphi 0, %s64
      %s66 = sphi 0, %s64
      %s67 = sphi 0, %s66
      %s81 = sphi 0, %s67
      %s85 = sphi 0, %s85
      %s87 = sphi 0, %s85
      %s88 = sphi 0, %s87
      %s102 = sphi 0, %s88
      %s110 = sphi 0, %s112
      %s113 = sphi 0, %s110
      %s114 = sphi 0, %s113
      %s130 = sphi 0, %s114
    $region4: #{tpu_custom_call.1} parent=1 // loop_header_branch
      %19 = sbr.rel (%p17) target = $region8
    $region5: #{tpu_custom_call.1} parent=1 // loop_body
      %s21 = ssub.s32 %s16, 1
      %s22 = ssub.s32 %s16, 2
      %s29 = sadd.s32 1, %s24
      %p30 = scmp.ge.s32.totalorder %s29, 1
      %s31 = scalar_select %p30, 0, %s29
      %s32 = sadd.s32 1, %s23
      %s33 = scalar_select %p30, %s32, %s23
      %p34 = scmp.ge.s32.totalorder %s33, 2
      %s35 = scalar_select %p34, 0, %s33
      %s36 = ssub.s32 %s23, %s35
      %s37 = ssub.s32 %s24, %s31
      %s38 = sor.u32 %s36, %s37
      %p39 = scmp.eq.s32.totalorder %s38, 0
      %s41 = sadd.s32 %s40, 1
      %s42 = scalar_select %p39, %s40, %s41
      %p45 = pneg %p39
      %p46 = scmp.eq.s32.totalorder %s16, 1
      %p47 = por %p45, %p46
      %p48 = scmp.ne.s32.totalorder %s40, %s43
      %p49 = scmp.eq.s32.totalorder %s16, 0
      %p50 = por %p48, %p49
      %p51 = scmp.ne.s32.totalorder %s40, %s43
      %p52 = scmp.eq.s32.totalorder %s21, 1
      %p53 = por %p51, %p52
      %p54 = scmp.ne.s32.totalorder %s43, %s44
      %p55 = scmp.eq.s32.totalorder %s21, 0
      %p56 = por %p54, %p55
      %p57 = scmp.ne.s32.totalorder %s43, %s44
      %p58 = scmp.eq.s32.totalorder %s22, 1
      %p59 = por %p57, %p58
      %p61 = scmp.ne.s32.totalorder %s44, %s60
      %p62 = scmp.eq.s32.totalorder %s22, 0
      %p63 = por %p61, %p62
      %s65 = sadd.s32 %s64, 1
      %p68 = scmp.eq.s32.totalorder %s16, 1
      %p69 = scmp.ne.s32.totalorder %s64, %s66
      %p70 = scmp.eq.s32.totalorder %s16, 0
      %p71 = por %p69, %p70
      %p72 = scmp.ne.s32.totalorder %s64, %s66
      %p73 = scmp.eq.s32.totalorder %s21, 1
      %p74 = por %p72, %p73
      %p75 = scmp.ne.s32.totalorder %s66, %s67
      %p76 = scmp.eq.s32.totalorder %s21, 0
      %p77 = por %p75, %p76
      %p78 = scmp.ne.s32.totalorder %s66, %s67
      %p79 = scmp.eq.s32.totalorder %s22, 1
      %p80 = por %p78, %p79
      %p82 = scmp.ne.s32.totalorder %s67, %s81
      %p83 = scmp.eq.s32.totalorder %s22, 0
      %p84 = por %p82, %p83
      %s86 = sadd.s32 %s85, 1
      %p89 = scmp.eq.s32.totalorder %s16, 1
      %p90 = scmp.ne.s32.totalorder %s85, %s87
      %p91 = scmp.eq.s32.totalorder %s16, 0
      %p92 = por %p90, %p91
      %p93 = scmp.ne.s32.totalorder %s85, %s87
      %p94 = scmp.eq.s32.totalorder %s21, 1
      %p95 = por %p93, %p94
      %p96 = scmp.ne.s32.totalorder %s87, %s88
      %p97 = scmp.eq.s32.totalorder %s21, 0
      %p98 = por %p96, %p97
      %p99 = scmp.ne.s32.totalorder %s87, %s88
      %p100 = scmp.eq.s32.totalorder %s22, 1
      %p101 = por %p99, %p100
      %p103 = scmp.ne.s32.totalorder %s88, %s102
      %p104 = scmp.eq.s32.totalorder %s22, 0
      %p105 = por %p103, %p104
      %s106 = ssub.s32 %s23, %s35
      %s107 = ssub.s32 %s24, %s31
      %s108 = sor.u32 %s106, %s107
      %p109 = scmp.eq.s32.totalorder %s108, 0
      %s111 = sadd.s32 %s110, 1
      %s112 = scalar_select %p109, %s110, %s111
      %p115 = pneg %p109
      %p116 = scmp.eq.s32.totalorder %s16, 1
      %p117 = por %p115, %p116
      %p118 = scmp.ne.s32.totalorder %s110, %s113
      %p119 = scmp.eq.s32.totalorder %s16, 0
      %p120 = por %p118, %p119
      %p121 = scmp.ne.s32.totalorder %s110, %s113
      %p122 = scmp.eq.s32.totalorder %s21, 1
      %p123 = por %p121, %p122
      %p124 = scmp.ne.s32.totalorder %s113, %s114
      %p125 = scmp.eq.s32.totalorder %s21, 0
      %p126 = por %p124, %p125
      %p127 = scmp.ne.s32.totalorder %s113, %s114
      %p128 = scmp.eq.s32.totalorder %s22, 1
      %p129 = por %p127, %p128
      %p131 = scmp.ne.s32.totalorder %s114, %s130
      %p132 = scmp.eq.s32.totalorder %s22, 0
      %p133 = por %p131, %p132
      %p134 = scmp.le.s32.totalorder 1, %s16
      %p135 = scmp.lt.s32.totalorder %s16, 3
      %p136 = pnand %p134, %p135
      %p137 = pneg %p136
      // Predicated region
      $region9: #{tpu_custom_call.1} parent=5 // pred_check
        _
      $region10: #{tpu_custom_call.1} parent=5 // pred_check_branch
        %139 = sbr.rel (%p136) target = $region12
      $region11: #{tpu_custom_call.1} parent=5 // pred_region
        %s140 = ssub.s32 %s16, 1
        // Predicated region
        $region13: #{tpu_custom_call.1} parent=11 // pred_check
          %p141 = pneg %p77
        $region14: #{tpu_custom_call.1} parent=11 // pred_check_branch
          %143 = sbr.rel (%p141) target = $region16
        $region15: #{tpu_custom_call.1} parent=11 // pred_region
          %145 = vsyncadd [#allocation6], 0
          %s146 = sshll.u32 %s1, 4
          %s147 = int_to_ptr.hbm [resolvable:$true] %s146
          %s148 = sshll.u32 [#allocation5], 4
          %s149 = int_to_ptr.vmem [resolvable:$true] %s148
          %154 = dma.hbm_to_vmem [thread:$0]  %s147, 128, %s149, [#allocation6], 64, 64, 4
        $region16: #{tpu_custom_call.1} parent=11 // pred_fallthru
          _
        // Predicated region
        $region17: #{tpu_custom_call.1} parent=11 // pred_check
          %p155 = pneg %p98
        $region18: #{tpu_custom_call.1} parent=11 // pred_check_branch
          %157 = sbr.rel (%p155) target = $region20
        $region19: #{tpu_custom_call.1} parent=11 // pred_region
          %159 = vsyncadd [#allocation6], 0
          %s161 = sshll.u32 %s2, 4
          %s162 = int_to_ptr.hbm [resolvable:$true] %s161
          %s163 = sshll.u32 [#allocation7], 4
          %s164 = int_to_ptr.vmem [resolvable:$true] %s163
          %166 = dma.hbm_to_vmem [thread:$0]  %s162, 64, %s164, [#allocation6]
        $region20: #{tpu_custom_call.1} parent=11 // pred_fallthru
          _
      $region12: #{tpu_custom_call.1} parent=5 // pred_fallthru
        _
      %p167 = scmp.lt.s32.totalorder %s16, 2
      // Predicated region
      $region21: #{tpu_custom_call.1} parent=5 // pred_check
        %p168 = pneg %p167
      $region22: #{tpu_custom_call.1} parent=5 // pred_check_branch
        %170 = sbr.rel (%p168) target = $region24
      $region23: #{tpu_custom_call.1} parent=5 // pred_region
        // Predicated region
        $region25: #{tpu_custom_call.1} parent=23 // pred_check
          %p171 = pneg %p50
        $region26: #{tpu_custom_call.1} parent=23 // pred_check_branch
          %173 = sbr.rel (%p171) target = $region28
        $region27: #{tpu_custom_call.1} parent=23 // pred_region
          %s174 = sand.u32 %s40, 1
          %s175 = scalar_lea.sflag [#allocation3], %s174
          %s176 = sand.u32 %s40, 1
          %s177 = smul.addr %s176, 16
          %s178 = scalar_lea.vmem [#allocation2], %s177
          %180 = vsyncadd %s175, 0
          %s181 = smul.addr %s24, 2
          %s182 = smul.addr %s23, 2
          %s183 = sadd.s32 %s181, %s182
          %s184 = smul.addr %s183, 8
          %s185 = scalar_lea.hbm %s0, %s184
          %s186 = sshll.u32 %s185, 4
          %s187 = int_to_ptr.hbm [resolvable:$true] %s186
          %s188 = sshll.u32 %s178, 4
          %s189 = int_to_ptr.vmem [resolvable:$true] %s188
          %194 = dma.hbm_to_vmem [thread:$0]  %s187, 256, %s189, %s175, 128, 128, 8
        $region28: #{tpu_custom_call.1} parent=23 // pred_fallthru
          _
      $region24: #{tpu_custom_call.1} parent=5 // pred_fallthru
        _
      %p195 = scmp.le.s32.totalorder 1, %s16
      %p196 = scmp.lt.s32.totalorder %s16, 3
      %p197 = pnand %p195, %p196
      %p198 = pneg %p197
      // Predicated region
      $region29: #{tpu_custom_call.1} parent=5 // pred_check
        _
      $region30: #{tpu_custom_call.1} parent=5 // pred_check_branch
        %200 = sbr.rel (%p197) target = $region32
      $region31: #{tpu_custom_call.1} parent=5 // pred_region
        %s201 = ssub.s32 %s16, 1
        %s202 = sand.u32 %s43, 1
        %s203 = scalar_lea.sflag [#allocation3], %s202
        %s204 = sand.u32 %s43, 1
        %s205 = smul.addr %s204, 16
        %s206 = scalar_lea.vmem [#allocation2], %s205
        // Predicated region
        $region33: #{tpu_custom_call.1} parent=31 // pred_check
          %p207 = pneg %p56
        $region34: #{tpu_custom_call.1} parent=31 // pred_check_branch
          %209 = sbr.rel (%p207) target = $region36
        $region35: #{tpu_custom_call.1} parent=31 // pred_region
          %211 = dma.done %s203, 256
        $region36: #{tpu_custom_call.1} parent=31 // pred_fallthru
          _
        // Predicated region
        $region37: #{tpu_custom_call.1} parent=31 // pred_check
          %p212 = pneg %p77
        $region38: #{tpu_custom_call.1} parent=31 // pred_check_branch
          %214 = sbr.rel (%p212) target = $region40
        $region39: #{tpu_custom_call.1} parent=31 // pred_region
          %216 = dma.done [#allocation6], 128
        $region40: #{tpu_custom_call.1} parent=31 // pred_fallthru
          _
        // Predicated region
        $region41: #{tpu_custom_call.1} parent=31 // pred_check
          %p217 = pneg %p98
        $region42: #{tpu_custom_call.1} parent=31 // pred_check_branch
          %219 = sbr.rel (%p217) target = $region44
        $region43: #{tpu_custom_call.1} parent=31 // pred_region
          %221 = dma.done [#allocation6], 64
        $region44: #{tpu_custom_call.1} parent=31 // pred_fallthru
          _
        %s222 = sand.u32 %s43, 1
        %s223 = scalar_lea.sflag [#allocation3], %s222
        %s224 = sand.u32 %s43, 1
        %s225 = smul.addr %s224, 16
        %s226 = scalar_lea.vmem [#allocation2], %s225
        %p227 = pneg %p56
        %p228 = pneg %p53
        %p229 = pneg %p77
        %p230 = pneg %p74
        %p231 = pneg %p98
        %p232 = pneg %p95
        %p233 = pneg %p126
        %p234 = pneg %p123
        %s235 = sand.u32 %s113, 1
        %s236 = scalar_lea.sflag [#allocation4], %s235
        %s237 = sand.u32 %s113, 1
        %s238 = smul.addr %s237, 4
        %s239 = scalar_lea.vmem [#allocation8], %s238
        %v240 = vld [vmem:[%s206] sm:$0xff]
        %v241 = vld [vmem:[%s206 + $0x8] sm:$0xff]
        %v242 = vld [vmem:[#allocation5] sm:$0xf]
        %s243 = scalar_lea.vmem [#allocation5], 4
        %v244 = vld [vmem:[%s243] sm:$0xf]
        %247 = vrot.lane.b32.xlu0 %v240, 127
        %v248 = vpop.permute.xlu0 %247
        %249 = vrot.lane.b32.xlu0 %v241, 127
        %v250 = vpop.permute.xlu0 %249
        %vm253 = vcmask 130048
        %v255 = vsel %vm253, %v244, 0
        %257 = vmatpush.msra.mxu0 0.0
        %258 = vmatpush.msra.mxu0 0.0
        %259 = vmatpush.msra.mxu0 0.0
        %260 = vmatpush.msra.mxu0 0.0
        %261 = vmatpush.msra.mxu0 0.0
        %262 = vmatpush.msra.mxu0 0.0
        %263 = vmatpush.msra.mxu0 0.0
        %264 = vmatpush.msra.mxu0 0.0
        %265 = vmatpush.msra.mxu0 0.0
        %266 = vmatpush.msra.mxu0 0.0
        %267 = vmatpush.msra.mxu0 0.0
        %268 = vmatpush.msra.mxu0 0.0
        %269 = vmatpush.msra.mxu0 0.0
        %270 = vmatpush.msra.mxu0 0.0
        %271 = vmatpush.msra.mxu0 %v250
        %272 = vmatpush.msra.mxu0 %v248
        %273 = vmatmul.f32.gmra.mxu0 %v255
        %v274 = vpop.f32.mrf.mxu0
        %v275 = vadd.f32 0.0, %v274
        %276 = vdwg.mxu0
        %v278 = vsel %vm253, %v242, 0
        %280 = vmatpush.msra.mxu0 0.0
        %281 = vmatpush.msra.mxu0 0.0
        %282 = vmatpush.msra.mxu0 0.0
        %283 = vmatpush.msra.mxu0 0.0
        %284 = vmatpush.msra.mxu0 0.0
        %285 = vmatpush.msra.mxu0 0.0
        %286 = vmatpush.msra.mxu0 0.0
        %287 = vmatpush.msra.mxu0 0.0
        %288 = vmatpush.msra.mxu0 0.0
        %289 = vmatpush.msra.mxu0 0.0
        %290 = vmatpush.msra.mxu0 0.0
        %291 = vmatpush.msra.mxu0 0.0
        %292 = vmatpush.msra.mxu0 0.0
        %293 = vmatpush.msra.mxu0 0.0
        %294 = vmatpush.msra.mxu0 %v241
        %295 = vmatpush.msra.mxu0 %v240
        %296 = vmatmul.f32.gmra.mxu0 %v278
        %v297 = vpop.f32.mrf.mxu0
        %v298 = vadd.f32 %v275, %v297
        %299 = vdwg.mxu0
        %v300 = vld [vmem:[#allocation7] sm:$0xf]
        %302 = vset.pattern.permute.xlu0 0
        %303 = vperm.xlu0 %302, %v300
        %v304 = vpop.permute.xlu0 %303
        %v306 = vadd.f32 %v298, %v304
        %v307 = vmax.f32 %v306, 0.0
        %308 = vset.pattern.permute.xlu0 1
        %309 = vperm.xlu0 %308, %v300
        %v310 = vpop.permute.xlu0 %309
        %v312 = vmul.f32 %v307, %v310
        %313 = vset.pattern.permute.xlu0 2
        %314 = vperm.xlu0 %313, %v300
        %v315 = vpop.permute.xlu0 %314
        %v317 = vadd.f32 %v312, %v315
        %vm318 = vcmask 125952
        %319 = vst.msk [vmem:[%s239] sm:$0xf] %vm318, %v317
        %s320 = sand.u32 %s113, 1
        %s321 = scalar_lea.sflag [#allocation4], %s320
        %s322 = sand.u32 %s113, 1
        %s323 = smul.addr %s322, 4
        %s324 = scalar_lea.vmem [#allocation8], %s323
        // Predicated region
        $region45: #{tpu_custom_call.1} parent=31 // pred_check
          %p325 = pneg %p123
        $region46: #{tpu_custom_call.1} parent=31 // pred_check_branch
          %327 = sbr.rel (%p325) target = $region48
        $region47: #{tpu_custom_call.1} parent=31 // pred_region
          %329 = vsyncadd %s321, 0
          %s330 = sadd.s32 %s26, %s25
          %s331 = smul.addr %s330, 4
          %s332 = scalar_lea.hbm %s3, %s331
          %s334 = sshll.u32 %s324, 4
          %s335 = int_to_ptr.vmem [resolvable:$true] %s334
          %s336 = sshll.u32 %s332, 4
          %s337 = int_to_ptr.hbm [resolvable:$true] %s336
          %339 = dma.vmem_to_hbm [thread:$0]  %s335, 64, %s337, %s321
        $region48: #{tpu_custom_call.1} parent=31 // pred_fallthru
          _
      $region32: #{tpu_custom_call.1} parent=5 // pred_fallthru
        _
      %p340 = scmp.le.s32.totalorder 2, %s16
      // Predicated region
      $region49: #{tpu_custom_call.1} parent=5 // pred_check
        %p341 = pneg %p340
      $region50: #{tpu_custom_call.1} parent=5 // pred_check_branch
        %343 = sbr.rel (%p341) target = $region52
      $region51: #{tpu_custom_call.1} parent=5 // pred_region
        %s344 = ssub.s32 %s16, 2
        // Predicated region
        $region53: #{tpu_custom_call.1} parent=51 // pred_check
          %p345 = pneg %p129
        $region54: #{tpu_custom_call.1} parent=51 // pred_check_branch
          %347 = sbr.rel (%p345) target = $region56
        $region55: #{tpu_custom_call.1} parent=51 // pred_region
          %s348 = sand.u32 %s114, 1
          %s349 = scalar_lea.sflag [#allocation4], %s348
          %s350 = sand.u32 %s114, 1
          %s351 = smul.addr %s350, 4
          %s352 = scalar_lea.vmem [#allocation8], %s351
          %354 = dma.done %s349, 64
        $region56: #{tpu_custom_call.1} parent=51 // pred_fallthru
          _
      $region52: #{tpu_custom_call.1} parent=5 // pred_fallthru
        _
    $region6: #{tpu_custom_call.1} parent=1 // loop_footer
      %s20 = sadd.s32 1, %s16
    $region7: #{tpu_custom_call.1} parent=1 // loop_footer_branch
      %15 = sbr.rel target = $region3
    $region8: #{tpu_custom_call.1} parent=1 // loop_exit
      _
    %355 = vsyncpa [#allocation3], 1
    %s356 = scalar_lea.sflag [#allocation3], 1
    %357 = vsyncpa %s356, 1
    %358 = vsyncpa [#allocation6], 1
    %359 = vsyncpa [#allocation4], 1
    %s360 = scalar_lea.sflag [#allocation4], 1
    %361 = vsyncpa %s360, 1

</llo_original>
